<compile_context>
chip_gen: v6e
topology: v6e:2x2x1
jax: 0.10.0
libtpu: 0.0.40
codegen_flags: <defaults>
</compile_context>

<pallas_src>
import functools

import jax
import jax.numpy as jnp
from jax.experimental import pallas as pl
from jax.experimental.pallas import tpu as pltpu

HIDDEN = 128


def _round_up(x, m):
    return ((x + m - 1) // m) * m


def qnet_kernel(x_ref, w1_ref, b1_ref, w2_ref, b2_ref, w3_ref, b3_ref, out_ref):
    # All-f32 matmuls with f32 accumulation: at this size the kernel is
    # overhead/HBM-bound, not MXU-bound, so f32 costs nothing and keeps the
    # Q-values numerically tight (argmax-stable) vs. the reference.
    h1 = jnp.dot(x_ref[...], w1_ref[...], preferred_element_type=jnp.float32)
    h1 = jnp.maximum(h1 + b1_ref[...], 0.0)
    h2 = jnp.dot(h1, w2_ref[...], preferred_element_type=jnp.float32)
    h2 = jnp.maximum(h2 + b2_ref[...], 0.0)
    out = jnp.dot(h2, w3_ref[...], preferred_element_type=jnp.float32) + b3_ref[...]
    out_ref[...] = out.astype(out_ref.dtype)


@functools.partial(jax.jit, static_argnames=("block_b",))
def qnetwork_forward(x, params, *, block_b=512):
    """x: (B, state_size) float32. params: dict w1,b1,w2,b2,w3,b3 (f32).

    Returns (B, action_size) float32 Q-values.
    """
    w1, b1 = params["w1"], params["b1"]
    w2, b2 = params["w2"], params["b2"]
    w3, b3 = params["w3"], params["b3"]

    B, S = x.shape
    H = w1.shape[1]
    N = w3.shape[1]

    # Balanced batch tiles: pad only to sublane (8) alignment, and force >=2 tiles
    # for medium/large batches so both v7x TensorCores get work.
    B8 = _round_up(B, 8)
    num_tiles = pl.cdiv(B8, block_b)
    if B8 >= 128:
        num_tiles = max(num_tiles, 2)
    TB = _round_up(pl.cdiv(B8, num_tiles), 8)
    B_pad = TB * num_tiles

    if B_pad != B:
        # Bounded padding: at most ~8 rows per tile (B=300 -> 304, not 512).
        x = jnp.pad(x, ((0, B_pad - B), (0, 0)))

    const = lambda i: (0, 0)
    in_specs = [
        pl.BlockSpec((TB, S), lambda i: (i, 0)),  # x tile (per grid step)
        pl.BlockSpec((S, H), const),              # w1  (resident in VMEM)
        pl.BlockSpec((1, H), const),              # b1
        pl.BlockSpec((H, H), const),              # w2
        pl.BlockSpec((1, H), const),              # b2
        pl.BlockSpec((H, N), const),              # w3
        pl.BlockSpec((1, N), const),              # b3
    ]
    # Narrow output: only the N useful columns ever hit HBM.
    out_spec = pl.BlockSpec((TB, N), lambda i: (i, 0))

    out = pl.pallas_call(
        qnet_kernel,
        out_shape=jax.ShapeDtypeStruct((B_pad, N), jnp.float32),
        grid_spec=pltpu.PrefetchScalarGridSpec(
            num_scalar_prefetch=0,
            grid=(num_tiles,),
            in_specs=in_specs,
            out_specs=out_spec,
        ),
        compiler_params=pltpu.CompilerParams(
            dimension_semantics=("parallel",),
        ),
    )(x, w1, b1, w2, b2, w3, b3)

    # Static Python condition (shapes are static under jit); touches only (B_pad, N).
    return out[:B] if B_pad != B else out


def init_params(key, state_size, action_size, hidden=HIDDEN):
    """Deterministic init mimicking nn.Linear's uniform(-1/sqrt(fan_in), 1/sqrt(fan_in))."""
    ks = jax.random.split(key, 6)

    def linear(kw, kb, fan_in, fan_out):
        bound = 1.0 / jnp.sqrt(fan_in)
        w = jax.random.uniform(kw, (fan_in, fan_out), jnp.float32, -bound, bound)
        b = jax.random.uniform(kb, (1, fan_out), jnp.float32, -bound, bound)
        return w, b

    w1, b1 = linear(ks[0], ks[1], state_size, hidden)
    w2, b2 = linear(ks[2], ks[3], hidden, hidden)
    w3, b3 = linear(ks[4], ks[5], hidden, action_size)
    return {"w1": w1, "b1": b1, "w2": w2, "b2": b2, "w3": w3, "b3": b3}


def reference_forward(x, p):
    """Pure-JAX reference matching the PyTorch QNetwork.forward."""
    h1 = jnp.maximum(x @ p["w1"] + p["b1"], 0.0)
    h2 = jnp.maximum(h1 @ p["w2"] + p["b2"], 0.0)
    return h2 @ p["w3"] + p["b3"]


if __name__ == "__main__":
    key = jax.random.PRNGKey(0)
    k_param, k_x, k_x2 = jax.random.split(key, 3)

    state_size = 16
    action_size = 4
    params = init_params(k_param, state_size, action_size)

    # Small "online inference" batch (single tile, no padding, no slice).
    batch = 8
    x = jax.random.normal(k_x, (batch, state_size), jnp.float32)
    out = jax.block_until_ready(qnetwork_forward(x, params))
    ref = reference_forward(x, params)
    assert out.shape == (batch, action_size)
    assert jnp.allclose(out, ref, atol=2e-2, rtol=2e-2), float(
        jnp.max(jnp.abs(out - ref)))

    # Larger "replay" batch exercising balanced tiling + padding (300 -> 2 x 152).
    batch2 = 300
    x2 = jax.random.normal(k_x2, (batch2, state_size), jnp.float32)
    out2 = jax.block_until_ready(qnetwork_forward(x2, params))
    ref2 = reference_forward(x2, params)
    assert out2.shape == (batch2, action_size)
    assert jnp.allclose(out2, ref2, atol=2e-2, rtol=2e-2), float(
        jnp.max(jnp.abs(out2 - ref2)))

    print("KERNEL_OK")
</pallas_src>

<mosaic_0001>
module attributes {stable_mosaic.version = 11 : i64} {
  func.func @qnet_kernel(%arg0: i32, %arg1: memref<8x16xf32, #tpu.memory_space<vmem>>, %arg2: memref<16x128xf32, #tpu.memory_space<vmem>>, %arg3: memref<1x128xf32, #tpu.memory_space<vmem>>, %arg4: memref<128x128xf32, #tpu.memory_space<vmem>>, %arg5: memref<1x128xf32, #tpu.memory_space<vmem>>, %arg6: memref<128x4xf32, #tpu.memory_space<vmem>>, %arg7: memref<1x4xf32, #tpu.memory_space<vmem>>, %arg8: memref<8x4xf32, #tpu.memory_space<vmem>>) attributes {dimension_semantics = [#tpu.dimension_semantics<parallel>], iteration_bounds = array<i64: 1>, scalar_prefetch = 0 : i64, scratch_operands = 0 : i64, tpu.core_type = #tpu.core_type<tc>, window_params = [{transform_indices = @transform_0, window_bounds = array<i64: 8, 16>}, {pipeline_mode = #tpu.pipeline_mode<synchronous>, transform_indices = @transform_1, window_bounds = array<i64: 16, 128>}, {pipeline_mode = #tpu.pipeline_mode<synchronous>, transform_indices = @transform_2, window_bounds = array<i64: 1, 128>}, {pipeline_mode = #tpu.pipeline_mode<synchronous>, transform_indices = @transform_3, window_bounds = array<i64: 128, 128>}, {pipeline_mode = #tpu.pipeline_mode<synchronous>, transform_indices = @transform_4, window_bounds = array<i64: 1, 128>}, {pipeline_mode = #tpu.pipeline_mode<synchronous>, transform_indices = @transform_5, window_bounds = array<i64: 128, 4>}, {pipeline_mode = #tpu.pipeline_mode<synchronous>, transform_indices = @transform_6, window_bounds = array<i64: 1, 4>}, {transform_indices = @transform_7, window_bounds = array<i64: 8, 4>}]} {
    %c0 = arith.constant 0 : index
    %c0_0 = arith.constant 0 : index
    %0 = vector.load %arg1[%c0, %c0_0] : memref<8x16xf32, #tpu.memory_space<vmem>>, vector<8x16xf32>
    %c0_1 = arith.constant 0 : index
    %c0_2 = arith.constant 0 : index
    %1 = vector.load %arg2[%c0_1, %c0_2] : memref<16x128xf32, #tpu.memory_space<vmem>>, vector<16x128xf32>
    %cst = arith.constant dense<0.000000e+00> : vector<8x128xf32>
    %2 = tpu.matmul %0, %1, %cst {dimension_numbers = #tpu.dot_dimension_numbers<[1], [0], [0], [1], [0, 0, 1, 1], [], []>} : vector<8x16xf32>, vector<16x128xf32>, vector<8x128xf32> -> vector<8x128xf32>
    %c0_3 = arith.constant 0 : index
    %c0_4 = arith.constant 0 : index
    %3 = vector.load %arg3[%c0_3, %c0_4] : memref<1x128xf32, #tpu.memory_space<vmem>>, vector<1x128xf32>
    %4 = vector.broadcast %3 : vector<1x128xf32> to vector<8x128xf32>
    %5 = arith.addf %2, %4 : vector<8x128xf32>
    %cst_5 = arith.constant 0.000000e+00 : f32
    %6 = vector.broadcast %cst_5 : f32 to vector<8x128xf32>
    %7 = arith.maximumf %5, %6 : vector<8x128xf32>
    %c0_6 = arith.constant 0 : index
    %c0_7 = arith.constant 0 : index
    %8 = vector.load %arg4[%c0_6, %c0_7] : memref<128x128xf32, #tpu.memory_space<vmem>>, vector<128x128xf32>
    %cst_8 = arith.constant dense<0.000000e+00> : vector<8x128xf32>
    %9 = tpu.matmul %7, %8, %cst_8 {dimension_numbers = #tpu.dot_dimension_numbers<[1], [0], [0], [1], [0, 0, 1, 1], [], []>} : vector<8x128xf32>, vector<128x128xf32>, vector<8x128xf32> -> vector<8x128xf32>
    %c0_9 = arith.constant 0 : index
    %c0_10 = arith.constant 0 : index
    %10 = vector.load %arg5[%c0_9, %c0_10] : memref<1x128xf32, #tpu.memory_space<vmem>>, vector<1x128xf32>
    %11 = vector.broadcast %10 : vector<1x128xf32> to vector<8x128xf32>
    %12 = arith.addf %9, %11 : vector<8x128xf32>
    %cst_11 = arith.constant 0.000000e+00 : f32
    %13 = vector.broadcast %cst_11 : f32 to vector<8x128xf32>
    %14 = arith.maximumf %12, %13 : vector<8x128xf32>
    %c0_12 = arith.constant 0 : index
    %c0_13 = arith.constant 0 : index
    %15 = vector.load %arg6[%c0_12, %c0_13] : memref<128x4xf32, #tpu.memory_space<vmem>>, vector<128x4xf32>
    %cst_14 = arith.constant dense<0.000000e+00> : vector<8x4xf32>
    %16 = tpu.matmul %14, %15, %cst_14 {dimension_numbers = #tpu.dot_dimension_numbers<[1], [0], [0], [1], [0, 0, 1, 1], [], []>} : vector<8x128xf32>, vector<128x4xf32>, vector<8x4xf32> -> vector<8x4xf32>
    %c0_15 = arith.constant 0 : index
    %c0_16 = arith.constant 0 : index
    %17 = vector.load %arg7[%c0_15, %c0_16] : memref<1x4xf32, #tpu.memory_space<vmem>>, vector<1x4xf32>
    %18 = vector.broadcast %17 : vector<1x4xf32> to vector<8x4xf32>
    %19 = arith.addf %16, %18 : vector<8x4xf32>
    %c0_17 = arith.constant 0 : index
    %c0_18 = arith.constant 0 : index
    %20 = vector.load %arg8[%c0_17, %c0_18] : memref<8x4xf32, #tpu.memory_space<vmem>>, vector<8x4xf32>
    tpu.vector_store %arg8[%c0_17, %c0_18], %19 {strides = array<i32>} : memref<8x4xf32, #tpu.memory_space<vmem>>, vector<8x4xf32>,
    return
  }
  func.func @transform_0(%arg0: i32) -> (i32, i32) {
    %c0_i32 = arith.constant 0 : i32
    %c0_i32_0 = arith.constant 0 : i32
    return %arg0, %c0_i32 : i32, i32
  }
  func.func @transform_1(%arg0: i32) -> (i32, i32) {
    %c0_i32 = arith.constant 0 : i32
    %c0_i32_0 = arith.constant 0 : i32
    %c0_i32_1 = arith.constant 0 : i32
    return %c0_i32, %c0_i32_0 : i32, i32
  }
  func.func @transform_2(%arg0: i32) -> (i32, i32) {
    %c0_i32 = arith.constant 0 : i32
    %c0_i32_0 = arith.constant 0 : i32
    %c0_i32_1 = arith.constant 0 : i32
    return %c0_i32, %c0_i32_0 : i32, i32
  }
  func.func @transform_3(%arg0: i32) -> (i32, i32) {
    %c0_i32 = arith.constant 0 : i32
    %c0_i32_0 = arith.constant 0 : i32
    %c0_i32_1 = arith.constant 0 : i32
    return %c0_i32, %c0_i32_0 : i32, i32
  }
  func.func @transform_4(%arg0: i32) -> (i32, i32) {
    %c0_i32 = arith.constant 0 : i32
    %c0_i32_0 = arith.constant 0 : i32
    %c0_i32_1 = arith.constant 0 : i32
    return %c0_i32, %c0_i32_0 : i32, i32
  }
  func.func @transform_5(%arg0: i32) -> (i32, i32) {
    %c0_i32 = arith.constant 0 : i32
    %c0_i32_0 = arith.constant 0 : i32
    %c0_i32_1 = arith.constant 0 : i32
    return %c0_i32, %c0_i32_0 : i32, i32
  }
  func.func @transform_6(%arg0: i32) -> (i32, i32) {
    %c0_i32 = arith.constant 0 : i32
    %c0_i32_0 = arith.constant 0 : i32
    %c0_i32_1 = arith.constant 0 : i32
    return %c0_i32, %c0_i32_0 : i32, i32
  }
  func.func @transform_7(%arg0: i32) -> (i32, i32) {
    %c0_i32 = arith.constant 0 : i32
    %c0_i32_0 = arith.constant 0 : i32
    return %arg0, %c0_i32 : i32, i32
  }
}

</mosaic_0001>

<llo_original>
// kernel: qnetwork_forward.1
$region0: #{qnetwork_forward.1}
  #allocation0 [shape = 'u32[]', space=smem, size = 0x4, offset = 0x4, fixed_abs, tag = 'smem constant byte address 0x4 - core index']
  #allocation1 [shape = 'u32[144,128]{1,0:T(1,128)}', space=vmem, size = 0x12000, scoped, tag = 'internal scratch']
  %s0 = inlined_call_operand.vmem [shape: f32[8,16], index: 0, kind: input, shape index: {}]
  %s1 = inlined_call_operand.hbm [shape: f32[16,128], index: 1, kind: input, shape index: {}]
  %s2 = inlined_call_operand.vmem [shape: f32[1,128], index: 2, kind: input, shape index: {}]
  %s3 = inlined_call_operand.vmem [shape: f32[128,128], index: 3, kind: input, shape index: {}]
  %s4 = inlined_call_operand.vmem [shape: f32[1,128], index: 4, kind: input, shape index: {}]
  %s5 = inlined_call_operand.vmem [shape: f32[128,4], index: 5, kind: input, shape index: {}]
  %s6 = inlined_call_operand.hbm [shape: f32[1,4], index: 6, kind: input, shape index: {}]
  %s7 = inlined_call_operand.vmem [shape: f32[8,4], index: 7, kind: output, shape index: {}]
  %s8 = sld [smem:[#allocation0]]
  $region46: #{qnetwork_forward.1} parent=0
    _
  %s10 = ssub.s32 1, %s8
  %s11 = scalar_select 0, %s10, %s8
  $region1: #{qnetwork_forward.1} parent=0
    #allocation2 [shape = 'u8[8192]{0}', space=vmem, size = 0x2000, scoped, tag = 'input window, operand 1, single buffered']
    #allocation3 [shape = 's32[1]{0}', space=sflag, size = 0x4, scoped, tag = 'scoped memory for qnetwork_forward.1']
    #allocation4 [shape = 'u8[512]{0}', space=vmem, size = 0x400, scoped, tag = 'input window, operand 6, single buffered']
    #allocation5 [shape = 's32[1]{0}', space=sflag, size = 0x4, scoped, tag = 'scoped memory for qnetwork_forward.1']
    %12 = vsyncpa [#allocation3], 0
    %13 = vsyncpa [#allocation5], 0
    // Predicated region
    $region2: #{qnetwork_forward.1} parent=1 // pred_check
      _
    $region3: #{qnetwork_forward.1} parent=1 // pred_check_branch
      %15 = sbr.rel (0) target = $region5
    $region4: #{qnetwork_forward.1} parent=1 // pred_region
      _
    $region5: #{qnetwork_forward.1} parent=1 // pred_fallthru
      _
    // Predicated region
    $region6: #{qnetwork_forward.1} parent=1 // pred_check
      _
    $region7: #{qnetwork_forward.1} parent=1 // pred_check_branch
      %17 = sbr.rel (0) target = $region9
    $region8: #{qnetwork_forward.1} parent=1 // pred_region
      %s19 = ssub.s32 256, 256
      %20 = vsyncadd [#allocation3], %s19
      %s21 = sshll.u32 [#allocation2], 4
      %s22 = int_to_ptr.vmem [resolvable:$true] %s21
      %27 = dma.hbm_to_vmem [thread:$0]  %s1, 256, %s22, [#allocation3], 128, 128, 8
    $region9: #{qnetwork_forward.1} parent=1 // pred_fallthru
      _
    // Predicated region
    $region10: #{qnetwork_forward.1} parent=1 // pred_check
      _
    $region11: #{qnetwork_forward.1} parent=1 // pred_check_branch
      %29 = sbr.rel (0) target = $region13
    $region12: #{qnetwork_forward.1} parent=1 // pred_region
      _
    $region13: #{qnetwork_forward.1} parent=1 // pred_fallthru
      _
    // Predicated region
    $region14: #{qnetwork_forward.1} parent=1 // pred_check
      _
    $region15: #{qnetwork_forward.1} parent=1 // pred_check_branch
      %31 = sbr.rel (0) target = $region17
    $region16: #{qnetwork_forward.1} parent=1 // pred_region
      _
    $region17: #{qnetwork_forward.1} parent=1 // pred_fallthru
      _
    // Predicated region
    $region18: #{qnetwork_forward.1} parent=1 // pred_check
      _
    $region19: #{qnetwork_forward.1} parent=1 // pred_check_branch
      %33 = sbr.rel (0) target = $region21
    $region20: #{qnetwork_forward.1} parent=1 // pred_region
      _
    $region21: #{qnetwork_forward.1} parent=1 // pred_fallthru
      _
    // Predicated region
    $region22: #{qnetwork_forward.1} parent=1 // pred_check
      _
    $region23: #{qnetwork_forward.1} parent=1 // pred_check_branch
      %35 = sbr.rel (0) target = $region25
    $region24: #{qnetwork_forward.1} parent=1 // pred_region
      _
    $region25: #{qnetwork_forward.1} parent=1 // pred_fallthru
      _
    // Predicated region
    $region26: #{qnetwork_forward.1} parent=1 // pred_check
      _
    $region27: #{qnetwork_forward.1} parent=1 // pred_check_branch
      %37 = sbr.rel (0) target = $region29
    $region28: #{qnetwork_forward.1} parent=1 // pred_region
      %s39 = ssub.s32 16, 16
      %40 = vsyncadd [#allocation5], %s39
      %s42 = sshll.u32 [#allocation4], 4
      %s43 = int_to_ptr.vmem [resolvable:$true] %s42
      %45 = dma.hbm_to_vmem [thread:$0]  %s6, 16, %s43, [#allocation5]
    $region29: #{qnetwork_forward.1} parent=1 // pred_fallthru
      _
    // Predicated region
    $region30: #{qnetwork_forward.1} parent=1 // pred_check
      _
    $region31: #{qnetwork_forward.1} parent=1 // pred_check_branch
      %47 = sbr.rel (0) target = $region33
    $region32: #{qnetwork_forward.1} parent=1 // pred_region
      %48 = dma.done [#allocation3], 256
    $region33: #{qnetwork_forward.1} parent=1 // pred_fallthru
      _
    // Predicated region
    $region34: #{qnetwork_forward.1} parent=1 // pred_check
      _
    $region35: #{qnetwork_forward.1} parent=1 // pred_check_branch
      %50 = sbr.rel (0) target = $region37
    $region36: #{qnetwork_forward.1} parent=1 // pred_region
      %51 = dma.done [#allocation5], 16
    $region37: #{qnetwork_forward.1} parent=1 // pred_fallthru
      _
    %v52 = vld [vmem:[%s0] sm:$0xff]
    %v53 = vld [vmem:[#allocation2] sm:$0xff]
    %v54 = vld [vmem:[#allocation2 + $0x8] sm:$0xff]
    %v55 = vld [vmem:[%s2] sm:$0x1]
    %v57 = vlaneseq
    %v58 = vshrl.u32 %v57, 7
    %v59 = vsub.s32 0, %v58
    %v60 = vrot.slane %v55, %v59
    %vm62 = vcmask 130048
    %v64 = vsel %vm62, %v52, 0
    %66 = vmatprep.subr.mxu0 0.0
    %67 = vmatpush1.msra.mxu0 0.0
    %68 = vmatprep.subr.mxu0 0.0
    %69 = vmatpush1.msra.mxu0 0.0
    %70 = vmatprep.subr.mxu0 0.0
    %71 = vmatpush1.msra.mxu0 0.0
    %72 = vmatprep.subr.mxu0 0.0
    %73 = vmatpush1.msra.mxu0 0.0
    %74 = vmatprep.subr.mxu0 0.0
    %75 = vmatpush1.msra.mxu0 0.0
    %76 = vmatprep.subr.mxu0 0.0
    %77 = vmatpush1.msra.mxu0 0.0
    %78 = vmatprep.subr.mxu0 0.0
    %79 = vmatpush1.msra.mxu0 0.0
    %80 = vmatprep.subr.mxu0 0.0
    %81 = vmatpush1.msra.mxu0 0.0
    %82 = vmatprep.subr.mxu0 0.0
    %83 = vmatpush1.msra.mxu0 0.0
    %84 = vmatprep.subr.mxu0 0.0
    %85 = vmatpush1.msra.mxu0 0.0
    %86 = vmatprep.subr.mxu0 0.0
    %87 = vmatpush1.msra.mxu0 0.0
    %88 = vmatprep.subr.mxu0 0.0
    %89 = vmatpush1.msra.mxu0 0.0
    %90 = vmatprep.subr.mxu0 0.0
    %91 = vmatpush1.msra.mxu0 0.0
    %92 = vmatprep.subr.mxu0 0.0
    %93 = vmatpush1.msra.mxu0 0.0
    %94 = vmatprep.subr.mxu0 0.0
    %95 = vmatpush1.msra.mxu0 %v54
    %96 = vmatprep.subr.mxu0 0.0
    %97 = vmatpush1.msra.mxu0 %v53
    %98 = vmatprep.subr.mxu0 0.0
    %99 = vmatpush2.msra.mxu0 0.0
    %100 = vmatprep.subr.mxu0 0.0
    %101 = vmatpush2.msra.mxu0 0.0
    %102 = vmatprep.subr.mxu0 0.0
    %103 = vmatpush2.msra.mxu0 0.0
    %104 = vmatprep.subr.mxu0 0.0
    %105 = vmatpush2.msra.mxu0 0.0
    %106 = vmatprep.subr.mxu0 0.0
    %107 = vmatpush2.msra.mxu0 0.0
    %108 = vmatprep.subr.mxu0 0.0
    %109 = vmatpush2.msra.mxu0 0.0
    %110 = vmatprep.subr.mxu0 0.0
    %111 = vmatpush2.msra.mxu0 0.0
    %112 = vmatprep.subr.mxu0 0.0
    %113 = vmatpush2.msra.mxu0 0.0
    %114 = vmatprep.subr.mxu0 0.0
    %115 = vmatpush2.msra.mxu0 0.0
    %116 = vmatprep.subr.mxu0 0.0
    %117 = vmatpush2.msra.mxu0 0.0
    %118 = vmatprep.subr.mxu0 0.0
    %119 = vmatpush2.msra.mxu0 0.0
    %120 = vmatprep.subr.mxu0 0.0
    %121 = vmatpush2.msra.mxu0 0.0
    %122 = vmatprep.subr.mxu0 0.0
    %123 = vmatpush2.msra.mxu0 0.0
    %124 = vmatprep.subr.mxu0 0.0
    %125 = vmatpush2.msra.mxu0 0.0
    %126 = vmatprep.subr.mxu0 0.0
    %127 = vmatpush2.msra.mxu0 0.0
    %128 = vmatprep.subr.mxu0 0.0
    %129 = vmatpush2.msra.mxu0 0.0
    %130 = vmatprep.mubr.f32.mxu0 0.0
    %131 = vmatmul.mubr.f32.gmra.mxu0 %v64
    %v132 = vpop.f32.mrf.mxu0
    %v133 = vadd.f32 %v60, %v132
    %v134 = vpop.f32.mrf.mxu0
    %135 = vdwg.mxu0
    %v136 = vmax.f32 %v133, 0.0
    %v137 = vld [vmem:[%s3] sm:$0xff]
    %v138 = vld [vmem:[%s3 + $0x8] sm:$0xff]
    %v139 = vld [vmem:[%s3 + $0x10] sm:$0xff]
    %v140 = vld [vmem:[%s3 + $0x18] sm:$0xff]
    %v141 = vld [vmem:[%s3 + $0x20] sm:$0xff]
    %v142 = vld [vmem:[%s3 + $0x28] sm:$0xff]
    %v143 = vld [vmem:[%s3 + $0x30] sm:$0xff]
    %v144 = vld [vmem:[%s3 + $0x38] sm:$0xff]
    %v145 = vld [vmem:[%s3 + $0x40] sm:$0xff]
    %v146 = vld [vmem:[%s3 + $0x48] sm:$0xff]
    %v147 = vld [vmem:[%s3 + $0x50] sm:$0xff]
    %v148 = vld [vmem:[%s3 + $0x58] sm:$0xff]
    %v149 = vld [vmem:[%s3 + $0x60] sm:$0xff]
    %v150 = vld [vmem:[%s3 + $0x68] sm:$0xff]
    %v151 = vld [vmem:[%s3 + $0x70] sm:$0xff]
    %v152 = vld [vmem:[%s3 + $0x78] sm:$0xff]
    %v153 = vld [vmem:[%s4] sm:$0x1]
    %v155 = vlaneseq
    %v156 = vshrl.u32 %v155, 7
    %v157 = vsub.s32 0, %v156
    %v158 = vrot.slane %v153, %v157
    %160 = vmatprep.subr.mxu0 0.0
    %161 = vmatpush1.msra.mxu0 %v152
    %162 = vmatprep.subr.mxu0 0.0
    %163 = vmatpush1.msra.mxu0 %v151
    %164 = vmatprep.subr.mxu0 0.0
    %165 = vmatpush1.msra.mxu0 %v150
    %166 = vmatprep.subr.mxu0 0.0
    %167 = vmatpush1.msra.mxu0 %v149
    %168 = vmatprep.subr.mxu0 0.0
    %169 = vmatpush1.msra.mxu0 %v148
    %170 = vmatprep.subr.mxu0 0.0
    %171 = vmatpush1.msra.mxu0 %v147
    %172 = vmatprep.subr.mxu0 0.0
    %173 = vmatpush1.msra.mxu0 %v146
    %174 = vmatprep.subr.mxu0 0.0
    %175 = vmatpush1.msra.mxu0 %v145
    %176 = vmatprep.subr.mxu0 0.0
    %177 = vmatpush1.msra.mxu0 %v144
    %178 = vmatprep.subr.mxu0 0.0
    %179 = vmatpush1.msra.mxu0 %v143
    %180 = vmatprep.subr.mxu0 0.0
    %181 = vmatpush1.msra.mxu0 %v142
    %182 = vmatprep.subr.mxu0 0.0
    %183 = vmatpush1.msra.mxu0 %v141
    %184 = vmatprep.subr.mxu0 0.0
    %185 = vmatpush1.msra.mxu0 %v140
    %186 = vmatprep.subr.mxu0 0.0
    %187 = vmatpush1.msra.mxu0 %v139
    %188 = vmatprep.subr.mxu0 0.0
    %189 = vmatpush1.msra.mxu0 %v138
    %190 = vmatprep.subr.mxu0 0.0
    %191 = vmatpush1.msra.mxu0 %v137
    %192 = vmatprep.subr.mxu0 0.0
    %193 = vmatpush2.msra.mxu0 0.0
    %194 = vmatprep.subr.mxu0 0.0
    %195 = vmatpush2.msra.mxu0 0.0
    %196 = vmatprep.subr.mxu0 0.0
    %197 = vmatpush2.msra.mxu0 0.0
    %198 = vmatprep.subr.mxu0 0.0
    %199 = vmatpush2.msra.mxu0 0.0
    %200 = vmatprep.subr.mxu0 0.0
    %201 = vmatpush2.msra.mxu0 0.0
    %202 = vmatprep.subr.mxu0 0.0
    %203 = vmatpush2.msra.mxu0 0.0
    %204 = vmatprep.subr.mxu0 0.0
    %205 = vmatpush2.msra.mxu0 0.0
    %206 = vmatprep.subr.mxu0 0.0
    %207 = vmatpush2.msra.mxu0 0.0
    %208 = vmatprep.subr.mxu0 0.0
    %209 = vmatpush2.msra.mxu0 0.0
    %210 = vmatprep.subr.mxu0 0.0
    %211 = vmatpush2.msra.mxu0 0.0
    %212 = vmatprep.subr.mxu0 0.0
    %213 = vmatpush2.msra.mxu0 0.0
    %214 = vmatprep.subr.mxu0 0.0
    %215 = vmatpush2.msra.mxu0 0.0
    %216 = vmatprep.subr.mxu0 0.0
    %217 = vmatpush2.msra.mxu0 0.0
    %218 = vmatprep.subr.mxu0 0.0
    %219 = vmatpush2.msra.mxu0 0.0
    %220 = vmatprep.subr.mxu0 0.0
    %221 = vmatpush2.msra.mxu0 0.0
    %222 = vmatprep.subr.mxu0 0.0
    %223 = vmatpush2.msra.mxu0 0.0
    %224 = vmatprep.mubr.f32.mxu0 0.0
    %225 = vmatmul.mubr.f32.gmra.mxu0 %v136
    %v226 = vpop.f32.mrf.mxu0
    %v227 = vadd.f32 %v158, %v226
    %v228 = vpop.f32.mrf.mxu0
    %229 = vdwg.mxu0
    %v230 = vmax.f32 %v227, 0.0
    %v231 = vld [vmem:[%s5] sm:$0xff]
    %v232 = vld [vmem:[%s5 + $0x8] sm:$0xff]
    %v233 = vld [vmem:[%s5 + $0x10] sm:$0xff]
    %v234 = vld [vmem:[%s5 + $0x18] sm:$0xff]
    %v235 = vld [vmem:[%s5 + $0x20] sm:$0xff]
    %v236 = vld [vmem:[%s5 + $0x28] sm:$0xff]
    %v237 = vld [vmem:[%s5 + $0x30] sm:$0xff]
    %v238 = vld [vmem:[%s5 + $0x38] sm:$0xff]
    %v239 = vld [vmem:[%s5 + $0x40] sm:$0xff]
    %v240 = vld [vmem:[%s5 + $0x48] sm:$0xff]
    %v241 = vld [vmem:[%s5 + $0x50] sm:$0xff]
    %v242 = vld [vmem:[%s5 + $0x58] sm:$0xff]
    %v243 = vld [vmem:[%s5 + $0x60] sm:$0xff]
    %v244 = vld [vmem:[%s5 + $0x68] sm:$0xff]
    %v245 = vld [vmem:[%s5 + $0x70] sm:$0xff]
    %v246 = vld [vmem:[%s5 + $0x78] sm:$0xff]
    %v247 = vld [vmem:[#allocation4] sm:$0x1]
    %v249 = vlaneseq
    %v250 = vshrl.u32 %v249, 7
    %v251 = vsub.s32 0, %v250
    %v252 = vrot.slane %v247, %v251
    %254 = vmatprep.subr.mxu0 0.0
    %255 = vmatpush1.msra.mxu0 %v246
    %256 = vmatprep.subr.mxu0 0.0
    %257 = vmatpush1.msra.mxu0 %v245
    %258 = vmatprep.subr.mxu0 0.0
    %259 = vmatpush1.msra.mxu0 %v244
    %260 = vmatprep.subr.mxu0 0.0
    %261 = vmatpush1.msra.mxu0 %v243
    %262 = vmatprep.subr.mxu0 0.0
    %263 = vmatpush1.msra.mxu0 %v242
    %264 = vmatprep.subr.mxu0 0.0
    %265 = vmatpush1.msra.mxu0 %v241
    %266 = vmatprep.subr.mxu0 0.0
    %267 = vmatpush1.msra.mxu0 %v240
    %268 = vmatprep.subr.mxu0 0.0
    %269 = vmatpush1.msra.mxu0 %v239
    %270 = vmatprep.subr.mxu0 0.0
    %271 = vmatpush1.msra.mxu0 %v238
    %272 = vmatprep.subr.mxu0 0.0
    %273 = vmatpush1.msra.mxu0 %v237
    %274 = vmatprep.subr.mxu0 0.0
    %275 = vmatpush1.msra.mxu0 %v236
    %276 = vmatprep.subr.mxu0 0.0
    %277 = vmatpush1.msra.mxu0 %v235
    %278 = vmatprep.subr.mxu0 0.0
    %279 = vmatpush1.msra.mxu0 %v234
    %280 = vmatprep.subr.mxu0 0.0
    %281 = vmatpush1.msra.mxu0 %v233
    %282 = vmatprep.subr.mxu0 0.0
    %283 = vmatpush1.msra.mxu0 %v232
    %284 = vmatprep.subr.mxu0 0.0
    %285 = vmatpush1.msra.mxu0 %v231
    %286 = vmatprep.subr.mxu0 0.0
    %287 = vmatpush2.msra.mxu0 0.0
    %288 = vmatprep.subr.mxu0 0.0
    %289 = vmatpush2.msra.mxu0 0.0
    %290 = vmatprep.subr.mxu0 0.0
    %291 = vmatpush2.msra.mxu0 0.0
    %292 = vmatprep.subr.mxu0 0.0
    %293 = vmatpush2.msra.mxu0 0.0
    %294 = vmatprep.subr.mxu0 0.0
    %295 = vmatpush2.msra.mxu0 0.0
    %296 = vmatprep.subr.mxu0 0.0
    %297 = vmatpush2.msra.mxu0 0.0
    %298 = vmatprep.subr.mxu0 0.0
    %299 = vmatpush2.msra.mxu0 0.0
    %300 = vmatprep.subr.mxu0 0.0
    %301 = vmatpush2.msra.mxu0 0.0
    %302 = vmatprep.subr.mxu0 0.0
    %303 = vmatpush2.msra.mxu0 0.0
    %304 = vmatprep.subr.mxu0 0.0
    %305 = vmatpush2.msra.mxu0 0.0
    %306 = vmatprep.subr.mxu0 0.0
    %307 = vmatpush2.msra.mxu0 0.0
    %308 = vmatprep.subr.mxu0 0.0
    %309 = vmatpush2.msra.mxu0 0.0
    %310 = vmatprep.subr.mxu0 0.0
    %311 = vmatpush2.msra.mxu0 0.0
    %312 = vmatprep.subr.mxu0 0.0
    %313 = vmatpush2.msra.mxu0 0.0
    %314 = vmatprep.subr.mxu0 0.0
    %315 = vmatpush2.msra.mxu0 0.0
    %316 = vmatprep.subr.mxu0 0.0
    %317 = vmatpush2.msra.mxu0 0.0
    %318 = vmatprep.mubr.f32.mxu0 0.0
    %319 = vmatmul.mubr.f32.gmra.mxu0 %v230
    %v320 = vpop.f32.mrf.mxu0
    %v321 = vadd.f32 %v252, %v320
    %v322 = vpop.f32.mrf.mxu0
    %323 = vdwg.mxu0
    %vm324 = vcmask 31744
    %325 = vst.msk [vmem:[%s7] sm:$0xff] %vm324, %v321
    // Predicated region
    $region38: #{qnetwork_forward.1} parent=1 // pred_check
      _
    $region39: #{qnetwork_forward.1} parent=1 // pred_check_branch
      %327 = sbr.rel (0) target = $region41
    $region40: #{qnetwork_forward.1} parent=1 // pred_region
      _
    $region41: #{qnetwork_forward.1} parent=1 // pred_fallthru
      _
    // Predicated region
    $region42: #{qnetwork_forward.1} parent=1 // pred_check
      _
    $region43: #{qnetwork_forward.1} parent=1 // pred_check_branch
      %329 = sbr.rel (0) target = $region45
    $region44: #{qnetwork_forward.1} parent=1 // pred_region
      _
    $region45: #{qnetwork_forward.1} parent=1 // pred_fallthru
      _
    %330 = vsyncpa [#allocation3], 1
    %331 = vsyncpa [#allocation5], 1

</llo_original>
